<compile_context>
chip_gen: v7x
topology: tpu7x:2x2x1
jax: 0.10.0
libtpu: 0.0.40
codegen_flags: <defaults>
</compile_context>

<pallas_src>
import jax
import jax.numpy as jnp
from jax.experimental import pallas as pl
from jax.experimental.pallas import tpu as pltpu

EPS = 1e-5        # nn.BatchNorm1d default eps
F_PAD = 128       # lane-aligned feature width (87 -> 128)
NUM_CORES = 2     # leading "parallel" grid axis (v7x dual TC); harmless on 1-TC chips


def _round_up(x, m):
    return ((x + m - 1) // m) * m


# ------------------------- pass 1: BatchNorm statistics --------------------- #
def bn_stats_kernel(h_ref, out_ref):
    """Per-core per-feature [sum; sum_sq] over shifted bf16 atom tiles (f32 acc)."""
    @pl.when(pl.program_id(1) == 0)
    def _():
        out_ref[...] = jnp.zeros_like(out_ref)

    h = h_ref[...].astype(jnp.float32)                         # (TILE_N, 128)
    sums = jnp.sum(h, axis=0, keepdims=True)
    sqs = jnp.sum(h * h, axis=0, keepdims=True)
    pad = jnp.zeros((out_ref.shape[0] - 2, h.shape[1]), jnp.float32)
    out_ref[...] += jnp.concatenate([sums, sqs, pad], axis=0)  # (8, 128)


# ---------------- pass 2: BN-folded mlp0/mlp2 + per-structure sums ---------- #
def stress_kernel(h_ref, batch_ref,
                  w0_ref, b0_ref, w2a_ref, b2a_ref, w2b_ref, b2b_ref,
                  pooled_ref):
    i = pl.program_id(1)

    @pl.when(i == 0)
    def _():
        pooled_ref[...] = jnp.zeros_like(pooled_ref)

    # mlp0 (BatchNorm pre-folded into w0/b0): bf16 h straight to the MXU.
    h = h_ref[...]                                              # (TILE_N, 128) bf16
    x = jnp.dot(h, w0_ref[...], preferred_element_type=jnp.float32) + b0_ref[...]
    x = jnp.maximum(x, 0.0).astype(jnp.bfloat16)

    # mlp2: Linear(128, 64) + ReLU + Linear(64, 64)
    x = jnp.dot(x, w2a_ref[...], preferred_element_type=jnp.float32) + b2a_ref[...]
    x = jnp.maximum(x, 0.0).astype(jnp.bfloat16)
    x = jnp.dot(x, w2b_ref[...], preferred_element_type=jnp.float32) + b2b_ref[...]
    # x: (TILE_N, 64) f32

    # Segment sums via an in-kernel 0/1 one-hot matmul (padded atoms carry
    # id == S_pad and match nothing).
    s_pad = pooled_ref.shape[0]
    tile_n = x.shape[0]
    eq = (jax.lax.broadcasted_iota(jnp.int32, (s_pad, tile_n), 0)
          == batch_ref[...])                                    # (S_pad, TILE_N)
    seg = jnp.where(eq, 1.0, 0.0).astype(jnp.bfloat16)
    pooled_ref[...] += jnp.dot(seg, x.astype(jnp.bfloat16),
                               preferred_element_type=jnp.float32)   # (S_pad, 64)


# --------------- pass 3: combine cores + mean pooling + mlp3 ---------------- #
def finalize_kernel(part_ref, inv_cnt_ref, w3a_ref, b3a_ref, w3b_ref, b3b_ref,
                    out_ref):
    s_pad = out_ref.shape[0]
    pooled = part_ref[0:s_pad, :]
    for c in range(1, NUM_CORES):
        pooled = pooled + part_ref[c * s_pad:(c + 1) * s_pad, :]
    pooled = pooled * inv_cnt_ref[...]                          # mean readout
    p = jnp.dot(pooled, w3a_ref[...], preferred_element_type=jnp.float32) + b3a_ref[...]
    p = jnp.maximum(p, 0.0)
    out_ref[...] = (jnp.dot(p, w3b_ref[...], preferred_element_type=jnp.float32)
                    + b3b_ref[...])                             # (S_pad, 6)


# --------------------------------- wrapper ---------------------------------- #
def stress_pallas(h, batch, n_struct, params, *, max_tile_n=4096):
    """h: (n_atoms, 87) f32 node features; batch: (n_atoms,) int32 structure ids."""
    assert max_tile_n % 128 == 0
    n_atoms, feat = h.shape
    s_pad = _round_up(max(n_struct, 1), 8)

    tile_n = min(max_tile_n, _round_up(n_atoms, 128))
    tiles_total = -(-n_atoms // tile_n)
    tiles_per_core = -(-tiles_total // NUM_CORES)
    n_pad = NUM_CORES * tiles_per_core * tile_n

    # Shift by the first atom's features (exactly cancelled later via the folded
    # bias) so the bf16 stream and the E[x^2]-mean^2 stats are well conditioned.
    # Single padded copy, directly in bf16.  TODO(synk): in production, emit this
    # padded bf16 buffer directly from the feature builder to skip the f32 h.
    ref_row = h[0:1]                                            # (1, feat) f32
    h_pad = jnp.pad(h - ref_row,
                    ((0, n_pad - n_atoms), (0, F_PAD - feat))).astype(jnp.bfloat16)
    batch_pad = (jnp.full((1, n_pad), s_pad, jnp.int32)
                 .at[0, :n_atoms].set(batch.astype(jnp.int32)))

    cparams = pltpu.CompilerParams(
        dimension_semantics=("parallel", "arbitrary"),
        vmem_limit_bytes=32 * 1024 * 1024)
    grid = (NUM_CORES, tiles_per_core)

    h_spec = pl.BlockSpec((tile_n, F_PAD),
                          lambda c, i: (c * tiles_per_core + i, 0))

    # --- pass 1: global BN statistics (shifted sums, f32 accumulation) ------ #
    stats = pl.pallas_call(
        bn_stats_kernel,
        out_shape=jax.ShapeDtypeStruct((NUM_CORES * 8, F_PAD), jnp.float32),
        grid_spec=pltpu.PrefetchScalarGridSpec(
            num_scalar_prefetch=0, grid=grid,
            in_specs=[h_spec],
            out_specs=pl.BlockSpec((8, F_PAD), lambda c, i: (c, 0))),
        compiler_params=cparams,
    )(h_pad)

    stats3 = stats.reshape(NUM_CORES, 8, F_PAD)
    sum_all = jnp.sum(stats3[:, 0, :], axis=0)[None, :feat]
    sq_all = jnp.sum(stats3[:, 1, :], axis=0)[None, :feat]
    inv_n = 1.0 / float(n_atoms)
    mean_s = sum_all * inv_n                                    # mean of shifted h
    var = jnp.maximum(sq_all * inv_n - mean_s * mean_s, 0.0)    # biased (train mode)
    scale = params["gamma"] * jax.lax.rsqrt(var + EPS)          # (1, feat)

    # Fold BN affine into mlp0 (host side).
    w0_fold = params["w0"] * scale.T                            # (feat, 128)
    b0_fold = params["b0"] + (params["beta"] - mean_s * scale) @ params["w0"]
    w0p = jnp.pad(w0_fold, ((0, F_PAD - feat), (0, 0))).astype(jnp.bfloat16)
    w2a = params["w2a"].astype(jnp.bfloat16)
    w2b = params["w2b"].astype(jnp.bfloat16)

    # Per-structure reciprocal counts (mean readout), sublane-padded.
    counts = jax.ops.segment_sum(jnp.ones((n_atoms,), jnp.float32), batch,
                                 num_segments=n_struct)
    inv_cnt = jnp.zeros((s_pad, 1), jnp.float32).at[:n_struct, 0].set(
        1.0 / jnp.maximum(counts, 1.0))

    # --- pass 2: fused mlp0/mlp2 + per-core per-structure sums -------------- #
    def _const(a):
        return pl.BlockSpec(a.shape, lambda c, i: (0, 0))

    weight_args = (w0p, b0_fold, w2a, params["b2a"], w2b, params["b2b"])
    in_specs = ([h_spec,
                 pl.BlockSpec((1, tile_n),
                              lambda c, i: (0, c * tiles_per_core + i))]
                + [_const(a) for a in weight_args])

    flops = 2 * n_pad * (F_PAD * 128 + 128 * 64 + 64 * 64 + s_pad * 64)
    bytes_accessed = (h_pad.size * 2 + batch_pad.size * 4
                      + sum(int(a.size) * jnp.dtype(a.dtype).itemsize
                            for a in weight_args)
                      + NUM_CORES * s_pad * 64 * 4)

    partial = pl.pallas_call(
        stress_kernel,
        out_shape=jax.ShapeDtypeStruct((NUM_CORES * s_pad, 64), jnp.float32),
        grid_spec=pltpu.PrefetchScalarGridSpec(
            num_scalar_prefetch=0, grid=grid,
            in_specs=in_specs,
            out_specs=pl.BlockSpec((s_pad, 64), lambda c, i: (c, 0))),
        compiler_params=cparams,
        cost_estimate=pl.CostEstimate(flops=flops, transcendentals=0,
                                      bytes_accessed=bytes_accessed),
    )(h_pad, batch_pad, *weight_args)

    # --- pass 3: tiny epilogue (combine cores, mean, mlp3) ------------------ #
    epi_args = (partial, inv_cnt, params["w3a"], params["b3a"],
                params["w3b"], params["b3b"])

    def _epi_spec(a):
        return pl.BlockSpec(a.shape, lambda i: (0, 0))

    out_pad = pl.pallas_call(
        finalize_kernel,
        out_shape=jax.ShapeDtypeStruct((s_pad, 6), jnp.float32),
        grid_spec=pltpu.PrefetchScalarGridSpec(
            num_scalar_prefetch=0, grid=(1,),
            in_specs=[_epi_spec(a) for a in epi_args],
            out_specs=pl.BlockSpec((s_pad, 6), lambda i: (0, 0))),
        compiler_params=pltpu.CompilerParams(dimension_semantics=("arbitrary",)),
    )(*epi_args)

    return out_pad[:n_struct]


# ------------------------------ JAX glue ------------------------------------ #
def build_node_features(atom_prop, pos, cell, batch):
    """Replicates the feature construction in Stress.forward (no frac_pos attr)."""
    c = cell.reshape(-1, 9)                                      # (S, 9)
    outer = (c[:, None, :] * c[:, :, None]).reshape(-1, 81)      # (S, 81)
    cell_ravel = outer[batch]                                    # (N, 81)
    inv_cell = jnp.linalg.inv(cell)                              # (S, 3, 3)
    frac_pos = jnp.einsum("ni,nij->nj", pos, inv_cell[batch])    # pos @ cell^-1
    return jnp.concatenate([atom_prop, frac_pos, cell_ravel], axis=1)   # (N, 87)


def init_params(key, input_dim=3):
    """Deterministic PyTorch-style init (uniform +-1/sqrt(fan_in)); W stored (in, out)."""
    feat = input_dim + 3 + 81

    def linear(k, fan_in, fan_out):
        kw, kb = jax.random.split(k)
        bound = 1.0 / jnp.sqrt(float(fan_in))
        w = jax.random.uniform(kw, (fan_in, fan_out), jnp.float32, -bound, bound)
        b = jax.random.uniform(kb, (1, fan_out), jnp.float32, -bound, bound)
        return w, b

    k = jax.random.split(key, 7)
    w0, b0 = linear(k[0], feat, 128)
    w2a, b2a = linear(k[1], 128, 64)
    w2b, b2b = linear(k[2], 64, 64)
    w3a, b3a = linear(k[3], 64, 32)
    w3b, b3b = linear(k[4], 32, 6)
    gamma = 1.0 + 0.05 * jax.random.normal(k[5], (1, feat), jnp.float32)
    beta = 0.05 * jax.random.normal(k[6], (1, feat), jnp.float32)
    return dict(gamma=gamma, beta=beta, w0=w0, b0=b0, w2a=w2a, b2a=b2a,
                w2b=w2b, b2b=b2b, w3a=w3a, b3a=b3a, w3b=w3b, b3b=b3b)


# ----------------------------- pure-JAX reference ---------------------------- #
def stress_reference(h, batch, n_struct, params):
    mean = h.mean(0, keepdims=True)
    var = ((h - mean) ** 2).mean(0, keepdims=True)
    x = (h - mean) / jnp.sqrt(var + EPS) * params["gamma"] + params["beta"]
    x = jnp.maximum(x @ params["w0"] + params["b0"], 0.0)
    x = jnp.maximum(x @ params["w2a"] + params["b2a"], 0.0)
    x = x @ params["w2b"] + params["b2b"]
    sums = jax.ops.segment_sum(x, batch, num_segments=n_struct)
    counts = jax.ops.segment_sum(jnp.ones((x.shape[0], 1)), batch, num_segments=n_struct)
    pooled = sums / jnp.maximum(counts, 1.0)
    y = jnp.maximum(pooled @ params["w3a"] + params["b3a"], 0.0)
    return y @ params["w3b"] + params["b3b"]


def _run_case(key, n_atoms, sizes, max_tile_n):
    k_ap, k_pos, k_cell = jax.random.split(key, 3)
    n_struct = len(sizes)
    atom_prop = jax.random.normal(k_ap, (n_atoms, 3), jnp.float32)
    pos = jax.random.normal(k_pos, (n_atoms, 3), jnp.float32)
    cell = (0.1 * jax.random.normal(k_cell, (n_struct, 3, 3), jnp.float32)
            + 2.0 * jnp.eye(3, dtype=jnp.float32)[None])
    batch = jnp.concatenate(
        [jnp.full((sz,), sid, jnp.int32) for sid, sz in enumerate(sizes)])

    params = init_params(jax.random.PRNGKey(7), input_dim=3)
    h = build_node_features(atom_prop, pos, cell, batch)          # (N, 87)

    out = jax.block_until_ready(
        stress_pallas(h, batch, n_struct, params, max_tile_n=max_tile_n))
    ref = jax.block_until_ready(stress_reference(h, batch, n_struct, params))
    assert out.shape == (n_struct, 6)
    # bf16 h / bf16 matmul operands (f32 accumulation) vs f32 reference.
    assert jnp.allclose(out, ref, rtol=5e-2, atol=5e-2), (out, ref)


# ----------------------------------- main ------------------------------------ #
if __name__ == "__main__":
    key = jax.random.PRNGKey(0)
    k1, k2 = jax.random.split(key)

    # Small single-tile case (matches the original toy shapes).
    _run_case(k1, n_atoms=16, sizes=(8, 8), max_tile_n=4096)

    # Multi-tile case to exercise the gridded / dual-core accumulation.
    _run_case(k2, n_atoms=300, sizes=(100, 120, 80), max_tile_n=128)

    print("KERNEL_OK")
</pallas_src>

<mosaic_0001>
module attributes {stable_mosaic.version = 11 : i64} {
  func.func @bn_stats_kernel(%arg0: i32, %arg1: i32, %arg2: memref<128x128xbf16, #tpu.memory_space<vmem>>, %arg3: memref<8x128xf32, #tpu.memory_space<vmem>>) attributes {dimension_semantics = [#tpu.dimension_semantics<parallel>, #tpu.dimension_semantics<arbitrary>], iteration_bounds = array<i64: 2, 1>, scalar_prefetch = 0 : i64, scratch_operands = 0 : i64, tpu.core_type = #tpu.core_type<tc>, window_params = [{transform_indices = @transform_0, window_bounds = array<i64: 128, 128>}, {transform_indices = @transform_1, window_bounds = array<i64: 8, 128>}]} {
    %c0_i32 = arith.constant 0 : i32
    %0 = arith.cmpi eq, %arg1, %c0_i32 : i32
    %1 = arith.extui %0 : i1 to i32
    %c0_i32_0 = arith.constant 0 : i32
    %2 = arith.cmpi ne, %1, %c0_i32_0 : i32
    scf.if %2 {
      %cst_8 = arith.constant 0.000000e+00 : f32
      %15 = vector.broadcast %cst_8 : f32 to vector<8x128xf32>
      %c0_9 = arith.constant 0 : index
      %c0_10 = arith.constant 0 : index
      %16 = vector.load %arg3[%c0_9, %c0_10] : memref<8x128xf32, #tpu.memory_space<vmem>>, vector<8x128xf32>
      tpu.vector_store %arg3[%c0_9, %c0_10], %15 {strides = array<i32>} : memref<8x128xf32, #tpu.memory_space<vmem>>, vector<8x128xf32>,
    } else {
    }
    %c0 = arith.constant 0 : index
    %c0_1 = arith.constant 0 : index
    %3 = vector.load %arg2[%c0, %c0_1] : memref<128x128xbf16, #tpu.memory_space<vmem>>, vector<128x128xbf16>
    %4 = arith.extf %3 : vector<128x128xbf16> to vector<128x128xf32>
    %cst = arith.constant dense<0.000000e+00> : vector<128xf32>
    %5 = vector.multi_reduction <add>, %4, %cst [0] : vector<128x128xf32> to vector<128xf32>
    %6 = vector.shape_cast %5 : vector<128xf32> to vector<1x128xf32>
    %7 = arith.mulf %4, %4 : vector<128x128xf32>
    %cst_2 = arith.constant dense<0.000000e+00> : vector<128xf32>
    %8 = vector.multi_reduction <add>, %7, %cst_2 [0] : vector<128x128xf32> to vector<128xf32>
    %9 = vector.shape_cast %8 : vector<128xf32> to vector<1x128xf32>
    %cst_3 = arith.constant 0.000000e+00 : f32
    %10 = vector.broadcast %cst_3 : f32 to vector<6x128xf32>
    %c0_4 = arith.constant 0 : index
    %c0_5 = arith.constant 0 : index
    %11 = vector.load %arg3[%c0_4, %c0_5] : memref<8x128xf32, #tpu.memory_space<vmem>>, vector<8x128xf32>
    %12 = tpu.concatenate %6, %9, %10 in 0 : vector<1x128xf32>, vector<1x128xf32>, vector<6x128xf32> -> vector<8x128xf32>
    %13 = arith.addf %11, %12 : vector<8x128xf32>
    %c0_6 = arith.constant 0 : index
    %c0_7 = arith.constant 0 : index
    %14 = vector.load %arg3[%c0_6, %c0_7] : memref<8x128xf32, #tpu.memory_space<vmem>>, vector<8x128xf32>
    tpu.vector_store %arg3[%c0_6, %c0_7], %13 {strides = array<i32>} : memref<8x128xf32, #tpu.memory_space<vmem>>, vector<8x128xf32>,
    return
  }
  func.func @transform_0(%arg0: i32, %arg1: i32) -> (i32, i32) {
    %c1_i32 = arith.constant 1 : i32
    %0 = arith.muli %arg0, %c1_i32 : i32
    %1 = arith.addi %0, %arg1 : i32
    %c0_i32 = arith.constant 0 : i32
    %c0_i32_0 = arith.constant 0 : i32
    return %1, %c0_i32 : i32, i32
  }
  func.func @transform_1(%arg0: i32, %arg1: i32) -> (i32, i32) {
    %c0_i32 = arith.constant 0 : i32
    %c0_i32_0 = arith.constant 0 : i32
    return %arg0, %c0_i32 : i32, i32
  }
}

</mosaic_0001>

<llo_original>
// kernel: tpu_custom_call.1
$region0: #{tpu_custom_call.1}
  #allocation0 [shape = 'u32[]', space=smem, size = 0x4, offset = 0x4, fixed_abs, tag = 'smem constant byte address 0x4 - core index']
  #allocation1 [shape = 'u32[144,128]{1,0:T(1,128)}', space=vmem, size = 0x12000, scoped, tag = 'internal scratch']
  %s0 = inlined_call_operand.hbm [shape: bf16[256,128], index: 0, kind: input, shape index: {}]
  %s1 = inlined_call_operand.hbm [shape: f32[16,128], index: 1, kind: output, shape index: {}]
  %s2 = sld [smem:[#allocation0]]
  $region45: #{tpu_custom_call.1} parent=0
    _
  %s4 = ssub.s32 1, %s2
  %s5 = scalar_select 0, %s4, %s2
  $region1: #{tpu_custom_call.1} parent=0
    #allocation2 [shape = 'u8[65536]{0}', space=vmem, size = 0x10000, scoped, tag = 'input window, operand 0']
    #allocation3 [shape = 's32[2]{0}', space=sflag, size = 0x8, scoped, tag = 'scoped memory for tpu_custom_call.1']
    #allocation4 [shape = 's32[2]{0}', space=sflag, size = 0x8, scoped, tag = 'scoped memory for tpu_custom_call.1']
    #allocation5 [shape = 'u8[8192]{0}', space=vmem, size = 0x2000, scoped, tag = 'output window, operand 0']
    %6 = vsyncpa [#allocation3], 0
    %s7 = scalar_lea.sflag [#allocation3], 1
    %8 = vsyncpa %s7, 0
    %9 = vsyncpa [#allocation4], 0
    %s10 = scalar_lea.sflag [#allocation4], 1
    %11 = vsyncpa %s10, 0
    loop: start=0, step=1, limit=4
    $region2: #{tpu_custom_call.1} parent=1 // loop_pre_header
      _
    $region3: #{tpu_custom_call.1} parent=1 // loop_header
      %s13 = sphi 0, %s17
      %p14 = scmp.ge.s32.totalorder %s13, 4
      %s20 = sphi 0, %s32
      %s21 = sphi 0, %s28
      %s22 = sphi 0, %s20
      %s23 = sphi 0, %s21
      %s24 = sphi 0, %s22
      %s25 = sphi 0, %s23
      %s37 = sphi 0, %s39
      %s40 = sphi 0, %s37
      %s41 = sphi 0, %s40
      %s57 = sphi 0, %s41
      %s63 = sphi 0, %s65
      %s66 = sphi 0, %s63
      %s67 = sphi 0, %s66
      %s83 = sphi 0, %s67
    $region4: #{tpu_custom_call.1} parent=1 // loop_header_branch
      %16 = sbr.rel (%p14) target = $region8
    $region5: #{tpu_custom_call.1} parent=1 // loop_body
      %s18 = ssub.s32 %s13, 1
      %s19 = ssub.s32 %s13, 2
      %s26 = sadd.s32 1, %s21
      %p27 = scmp.ge.s32.totalorder %s26, 1
      %s28 = scalar_select %p27, 0, %s26
      %s29 = sadd.s32 1, %s20
      %s30 = scalar_select %p27, %s29, %s20
      %p31 = scmp.ge.s32.totalorder %s30, 2
      %s32 = scalar_select %p31, 0, %s30
      %s33 = sadd.s32 %s20, %s21
      %s34 = sadd.s32 %s32, %s28
      %s35 = ssub.s32 %s33, %s34
      %p36 = scmp.eq.s32.totalorder %s35, 0
      %s38 = sadd.s32 %s37, 1
      %s39 = scalar_select %p36, %s37, %s38
      %p42 = pneg %p36
      %p43 = scmp.eq.s32.totalorder %s13, 1
      %p44 = por %p42, %p43
      %p45 = scmp.ne.s32.totalorder %s37, %s40
      %p46 = scmp.eq.s32.totalorder %s13, 0
      %p47 = por %p45, %p46
      %p48 = scmp.ne.s32.totalorder %s37, %s40
      %p49 = scmp.eq.s32.totalorder %s18, 1
      %p50 = por %p48, %p49
      %p51 = scmp.ne.s32.totalorder %s40, %s41
      %p52 = scmp.eq.s32.totalorder %s18, 0
      %p53 = por %p51, %p52
      %p54 = scmp.ne.s32.totalorder %s40, %s41
      %p55 = scmp.eq.s32.totalorder %s19, 1
      %p56 = por %p54, %p55
      %p58 = scmp.ne.s32.totalorder %s41, %s57
      %p59 = scmp.eq.s32.totalorder %s19, 0
      %p60 = por %p58, %p59
      %s61 = ssub.s32 %s20, %s32
      %p62 = scmp.eq.s32.totalorder %s61, 0
      %s64 = sadd.s32 %s63, 1
      %s65 = scalar_select %p62, %s63, %s64
      %p68 = pneg %p62
      %p69 = scmp.eq.s32.totalorder %s13, 1
      %p70 = por %p68, %p69
      %p71 = scmp.ne.s32.totalorder %s63, %s66
      %p72 = scmp.eq.s32.totalorder %s13, 0
      %p73 = por %p71, %p72
      %p74 = scmp.ne.s32.totalorder %s63, %s66
      %p75 = scmp.eq.s32.totalorder %s18, 1
      %p76 = por %p74, %p75
      %p77 = scmp.ne.s32.totalorder %s66, %s67
      %p78 = scmp.eq.s32.totalorder %s18, 0
      %p79 = por %p77, %p78
      %p80 = scmp.ne.s32.totalorder %s66, %s67
      %p81 = scmp.eq.s32.totalorder %s19, 1
      %p82 = por %p80, %p81
      %p84 = scmp.ne.s32.totalorder %s67, %s83
      %p85 = scmp.eq.s32.totalorder %s19, 0
      %p86 = por %p84, %p85
      %p87 = scmp.le.s32.totalorder 1, %s13
      %p88 = scmp.lt.s32.totalorder %s13, 3
      %p89 = pnand %p87, %p88
      %p90 = pneg %p89
      // Predicated region
      $region9: #{tpu_custom_call.1} parent=5 // pred_check
        _
      $region10: #{tpu_custom_call.1} parent=5 // pred_check_branch
        %92 = sbr.rel (%p89) target = $region12
      $region11: #{tpu_custom_call.1} parent=5 // pred_region
        %s93 = ssub.s32 %s13, 1
      $region12: #{tpu_custom_call.1} parent=5 // pred_fallthru
        _
      %p94 = scmp.lt.s32.totalorder %s13, 2
      // Predicated region
      $region13: #{tpu_custom_call.1} parent=5 // pred_check
        %p95 = pneg %p94
      $region14: #{tpu_custom_call.1} parent=5 // pred_check_branch
        %97 = sbr.rel (%p95) target = $region16
      $region15: #{tpu_custom_call.1} parent=5 // pred_region
        // Predicated region
        $region17: #{tpu_custom_call.1} parent=15 // pred_check
          %p98 = pneg %p47
        $region18: #{tpu_custom_call.1} parent=15 // pred_check_branch
          %100 = sbr.rel (%p98) target = $region20
        $region19: #{tpu_custom_call.1} parent=15 // pred_region
          %s101 = sand.u32 %s37, 1
          %s102 = scalar_lea.sflag [#allocation3], %s101
          %s103 = sand.u32 %s37, 1
          %s104 = smul.addr %s103, 64
          %s105 = scalar_lea.vmem [#allocation2], %s104
          %s106 = sadd.s32 %s20, %s21
          %s107 = smul.u32 16, %s106
          %s109 = ssub.s32 1024, 1024
          %110 = vsyncadd %s102, %s109
          %s111 = smul.addr %s107, 64
          %s112 = scalar_lea.hbm %s0, %s111
          %s113 = sshll.u32 %s105, 4
          %s114 = int_to_ptr.vmem [resolvable:$true] %s113
          %119 = dma.hbm_to_vmem [thread:$0]  %s112, 1024, %s114, %s102, 64, 64, 4
        $region20: #{tpu_custom_call.1} parent=15 // pred_fallthru
          _
      $region16: #{tpu_custom_call.1} parent=5 // pred_fallthru
        _
      %p120 = scmp.le.s32.totalorder 1, %s13
      %p121 = scmp.lt.s32.totalorder %s13, 3
      %p122 = pnand %p120, %p121
      %p123 = pneg %p122
      // Predicated region
      $region21: #{tpu_custom_call.1} parent=5 // pred_check
        _
      $region22: #{tpu_custom_call.1} parent=5 // pred_check_branch
        %125 = sbr.rel (%p122) target = $region24
      $region23: #{tpu_custom_call.1} parent=5 // pred_region
        %s126 = ssub.s32 %s13, 1
        %s127 = sand.u32 %s40, 1
        %s128 = scalar_lea.sflag [#allocation3], %s127
        %s129 = sand.u32 %s40, 1
        %s130 = smul.addr %s129, 64
        %s131 = scalar_lea.vmem [#allocation2], %s130
        // Predicated region
        $region25: #{tpu_custom_call.1} parent=23 // pred_check
          %p132 = pneg %p53
        $region26: #{tpu_custom_call.1} parent=23 // pred_check_branch
          %134 = sbr.rel (%p132) target = $region28
        $region27: #{tpu_custom_call.1} parent=23 // pred_region
          %135 = dma.done %s128, 1024
        $region28: #{tpu_custom_call.1} parent=23 // pred_fallthru
          _
        %s136 = sand.u32 %s40, 1
        %s137 = scalar_lea.sflag [#allocation3], %s136
        %s138 = sand.u32 %s40, 1
        %s139 = smul.addr %s138, 64
        %s140 = scalar_lea.vmem [#allocation2], %s139
        %p141 = pneg %p53
        %p142 = pneg %p50
        %p143 = pneg %p79
        %p144 = pneg %p76
        %s145 = sand.u32 %s66, 1
        %s146 = scalar_lea.sflag [#allocation4], %s145
        %s147 = sand.u32 %s66, 1
        %s148 = smul.addr %s147, 8
        %s149 = scalar_lea.vmem [#allocation5], %s148
        %s150 = sadd.s32 %s22, %s23
        %s151 = smul.u32 16, %s150
        %p152 = scmp.eq.s32.totalorder %s23, 0
        // Predicated region
        $region29: #{tpu_custom_call.1} parent=23 // pred_check
          %p153 = pneg %p152
        $region30: #{tpu_custom_call.1} parent=23 // pred_check_branch
          %155 = sbr.rel (%p153) target = $region32
        $region31: #{tpu_custom_call.1} parent=23 // pred_region
          %156 = vst [vmem:[%s149] sm:$0xff] 0.0
        $region32: #{tpu_custom_call.1} parent=23 // pred_fallthru
          _
        %v157 = vld [vmem:[%s131] sm:$0xf]
        %v158 = vld [vmem:[%s131 + $0x4] sm:$0xf]
        %v159 = vld [vmem:[%s131 + $0x8] sm:$0xf]
        %v160 = vld [vmem:[%s131 + $0xc] sm:$0xf]
        %v161 = vld [vmem:[%s131 + $0x10] sm:$0xf]
        %v162 = vld [vmem:[%s131 + $0x14] sm:$0xf]
        %v163 = vld [vmem:[%s131 + $0x18] sm:$0xf]
        %v164 = vld [vmem:[%s131 + $0x1c] sm:$0xf]
        %v165 = vld [vmem:[%s131 + $0x20] sm:$0xf]
        %v166 = vld [vmem:[%s131 + $0x24] sm:$0xf]
        %v167 = vld [vmem:[%s131 + $0x28] sm:$0xf]
        %v168 = vld [vmem:[%s131 + $0x2c] sm:$0xf]
        %v169 = vld [vmem:[%s131 + $0x30] sm:$0xf]
        %v170 = vld [vmem:[%s131 + $0x34] sm:$0xf]
        %v171 = vld [vmem:[%s131 + $0x38] sm:$0xf]
        %v172 = vld [vmem:[%s131 + $0x3c] sm:$0xf]
        %v173 = vunpack.c.l.bf16 %v157
        %v174 = vunpack.c.l.bf16 %v158
        %v175 = vunpack.c.l.bf16 %v159
        %v176 = vunpack.c.l.bf16 %v160
        %v177 = vunpack.c.l.bf16 %v161
        %v178 = vunpack.c.l.bf16 %v162
        %v179 = vunpack.c.l.bf16 %v163
        %v180 = vunpack.c.l.bf16 %v164
        %v181 = vunpack.c.l.bf16 %v165
        %v182 = vunpack.c.l.bf16 %v166
        %v183 = vunpack.c.l.bf16 %v167
        %v184 = vunpack.c.l.bf16 %v168
        %v185 = vunpack.c.l.bf16 %v169
        %v186 = vunpack.c.l.bf16 %v170
        %v187 = vunpack.c.l.bf16 %v171
        %v188 = vunpack.c.l.bf16 %v172
        %v189 = vadd.f32 %v173, %v174
        %v190 = vadd.f32 %v189, %v175
        %v191 = vadd.f32 %v190, %v176
        %v192 = vadd.f32 %v191, %v177
        %v193 = vadd.f32 %v192, %v178
        %v194 = vadd.f32 %v193, %v179
        %v195 = vadd.f32 %v194, %v180
        %v196 = vadd.f32 %v195, %v181
        %v197 = vadd.f32 %v196, %v182
        %v198 = vadd.f32 %v197, %v183
        %v199 = vadd.f32 %v198, %v184
        %v200 = vadd.f32 %v199, %v185
        %v201 = vadd.f32 %v200, %v186
        %v202 = vadd.f32 %v201, %v187
        %v203 = vadd.f32 %v202, %v188
        %v204 = vrot.slane %v203, 4
        %v205 = vadd.f32 %v203, %v204
        %v206 = vrot.slane %v205, 2
        %v207 = vadd.f32 %v205, %v206
        %v208 = vrot.slane %v207, 1
        %v209 = vadd.f32 %v207, %v208
        %v210 = vmul.f32 %v173, %v173
        %v211 = vmul.f32 %v174, %v174
        %v212 = vmul.f32 %v175, %v175
        %v213 = vmul.f32 %v176, %v176
        %v214 = vmul.f32 %v177, %v177
        %v215 = vmul.f32 %v178, %v178
        %v216 = vmul.f32 %v179, %v179
        %v217 = vmul.f32 %v180, %v180
        %v218 = vmul.f32 %v181, %v181
        %v219 = vmul.f32 %v182, %v182
        %v220 = vmul.f32 %v183, %v183
        %v221 = vmul.f32 %v184, %v184
        %v222 = vmul.f32 %v185, %v185
        %v223 = vmul.f32 %v186, %v186
        %v224 = vmul.f32 %v187, %v187
        %v225 = vmul.f32 %v188, %v188
        %v226 = vadd.f32 %v210, %v211
        %v227 = vadd.f32 %v226, %v212
        %v228 = vadd.f32 %v227, %v213
        %v229 = vadd.f32 %v228, %v214
        %v230 = vadd.f32 %v229, %v215
        %v231 = vadd.f32 %v230, %v216
        %v232 = vadd.f32 %v231, %v217
        %v233 = vadd.f32 %v232, %v218
        %v234 = vadd.f32 %v233, %v219
        %v235 = vadd.f32 %v234, %v220
        %v236 = vadd.f32 %v235, %v221
        %v237 = vadd.f32 %v236, %v222
        %v238 = vadd.f32 %v237, %v223
        %v239 = vadd.f32 %v238, %v224
        %v240 = vadd.f32 %v239, %v225
        %v241 = vrot.slane %v240, 4
        %v242 = vadd.f32 %v240, %v241
        %v243 = vrot.slane %v242, 2
        %v244 = vadd.f32 %v242, %v243
        %v245 = vrot.slane %v244, 1
        %v246 = vadd.f32 %v244, %v245
        %v247 = vld [vmem:[%s149] sm:$0xff]
        %vm248 = vcmask 1040384
        %v249 = vsel %vm248, %v209, %v246
        %vm250 = vcmask 1041408
        %v251 = vsel %vm250, %v249, 0.0
        %v252 = vadd.f32 %v247, %v251
        %253 = vst [vmem:[%s149] sm:$0xff] %v252
        %s254 = sand.u32 %s66, 1
        %s255 = scalar_lea.sflag [#allocation4], %s254
        %s256 = sand.u32 %s66, 1
        %s257 = smul.addr %s256, 8
        %s258 = scalar_lea.vmem [#allocation5], %s257
        // Predicated region
        $region33: #{tpu_custom_call.1} parent=23 // pred_check
          %p259 = pneg %p76
        $region34: #{tpu_custom_call.1} parent=23 // pred_check_branch
          %261 = sbr.rel (%p259) target = $region36
        $region35: #{tpu_custom_call.1} parent=23 // pred_region
          %s263 = ssub.s32 128, 128
          %264 = vsyncadd %s255, %s263
          %s265 = smul.addr %s22, 128
          %s266 = scalar_lea.hbm %s1, %s265
          %s268 = sshll.u32 %s258, 4
          %s269 = int_to_ptr.vmem [resolvable:$true] %s268
          %271 = dma.vmem_to_hbm [thread:$0]  %s269, 128, %s266, %s255
        $region36: #{tpu_custom_call.1} parent=23 // pred_fallthru
          _
      $region24: #{tpu_custom_call.1} parent=5 // pred_fallthru
        _
      %p272 = scmp.le.s32.totalorder 2, %s13
      // Predicated region
      $region37: #{tpu_custom_call.1} parent=5 // pred_check
        %p273 = pneg %p272
      $region38: #{tpu_custom_call.1} parent=5 // pred_check_branch
        %275 = sbr.rel (%p273) target = $region40
      $region39: #{tpu_custom_call.1} parent=5 // pred_region
        %s276 = ssub.s32 %s13, 2
        // Predicated region
        $region41: #{tpu_custom_call.1} parent=39 // pred_check
          %p277 = pneg %p82
        $region42: #{tpu_custom_call.1} parent=39 // pred_check_branch
          %279 = sbr.rel (%p277) target = $region44
        $region43: #{tpu_custom_call.1} parent=39 // pred_region
          %s280 = sand.u32 %s67, 1
          %s281 = scalar_lea.sflag [#allocation4], %s280
          %s282 = sand.u32 %s67, 1
          %s283 = smul.addr %s282, 8
          %s284 = scalar_lea.vmem [#allocation5], %s283
          %285 = dma.done %s281, 128
        $region44: #{tpu_custom_call.1} parent=39 // pred_fallthru
          _
      $region40: #{tpu_custom_call.1} parent=5 // pred_fallthru
        _
    $region6: #{tpu_custom_call.1} parent=1 // loop_footer
      %s17 = sadd.s32 1, %s13
    $region7: #{tpu_custom_call.1} parent=1 // loop_footer_branch
      %12 = sbr.rel target = $region3
    $region8: #{tpu_custom_call.1} parent=1 // loop_exit
      _
    %286 = vsyncpa [#allocation3], 1
    %s287 = scalar_lea.sflag [#allocation3], 1
    %288 = vsyncpa %s287, 1
    %289 = vsyncpa [#allocation4], 1
    %s290 = scalar_lea.sflag [#allocation4], 1
    %291 = vsyncpa %s290, 1

</llo_original>
